<compile_context>
chip_gen: v6e
topology: v6e:2x2x1
jax: 0.10.0
libtpu: 0.0.40
codegen_flags: <defaults>
</compile_context>

<pallas_src>
import jax
import jax.numpy as jnp
from jax.experimental import pallas as pl
from jax.experimental.pallas import tpu as pltpu


def _round_up(x, m):
    return ((x + m - 1) // m) * m


# -----------------------------------------------------------------------------
# Kernel 1: support = X @ W   (row-tiled, f32 in / f32 out, W resident)
# -----------------------------------------------------------------------------
def _support_kernel(x_ref, w_ref, o_ref):
    o_ref[...] = jnp.dot(
        x_ref[...], w_ref[...], preferred_element_type=jnp.float32
    ).astype(o_ref.dtype)


# -----------------------------------------------------------------------------
# Kernel 2: out = adj @ support + bias, tiled (row, k).
# Accumulates directly into the resident f32 output block; bias is folded
# into the k == 0 init so the k == last step needs no epilogue.
# -----------------------------------------------------------------------------
def _make_aggregate_kernel(tk, support_resident):
    def kernel(adj_ref, s_ref, b_ref, o_ref):
        k = pl.program_id(1)

        @pl.when(k == 0)
        def _():
            o_ref[...] = jnp.broadcast_to(b_ref[...], o_ref.shape)

        adj_tile = adj_ref[...]
        if adj_tile.dtype != jnp.float32:
            adj_tile = adj_tile.astype(jnp.float32)

        if support_resident:
            start = pl.multiple_of(k * tk, tk)
            s_tile = s_ref[pl.ds(start, tk), :]
        else:
            s_tile = s_ref[...]

        o_ref[...] += jnp.dot(adj_tile, s_tile,
                              preferred_element_type=jnp.float32)

    return kernel


# -----------------------------------------------------------------------------
# Wrapper
# -----------------------------------------------------------------------------
def graph_convolution(x, adj, weight, bias=None, *, tm=512, tk=1024,
                      resident_support_budget_bytes=16 << 20):
    """Pallas GCN forward.

    x: [N, F_in], adj: [N, N] (dense), weight: [F_in, F_out],
    bias: [F_out] or None.  Returns [N, F_out] float32.
    tm/tk should be powers of two (rounded up if not).
    """
    n, f_in = x.shape
    assert weight.shape[0] == f_in
    assert adj.shape == (n, n)
    f_out = weight.shape[1]

    x = x.astype(jnp.float32)
    weight = weight.astype(jnp.float32)

    # Lane-dense output: pad F_out to a multiple of 128 (sliced back below).
    # Lane-aligned X@W: pad F_in to a multiple of 128 (X / W are tiny).
    f_out_p = _round_up(f_out, 128)
    f_in_p = _round_up(f_in, 128)

    # Power-of-two tiles clamped to the problem; respect (8, 128) minimums.
    n_pow2 = pl.next_power_of_2(n)
    tm = max(8, min(pl.next_power_of_2(tm), n_pow2))
    tk = max(128, min(pl.next_power_of_2(tk), n_pow2))
    # Powers of two => padding to max() makes both tiles divide n_p exactly.
    n_p = _round_up(n, max(tm, tk))
    # v7x has 2 TensorCores: keep >= 2 row tiles so "parallel" can shard them.
    if n_p // tm < 2 and tm > 8:
        tm = max(8, tm // 2)

    itemsize = 4  # f32

    # ---- support = X @ W (computed once, f32) ----
    x_p = x if (n_p == n and f_in_p == f_in) else jnp.pad(
        x, ((0, n_p - n), (0, f_in_p - f_in)))
    w_p = weight if (f_in_p == f_in and f_out_p == f_out) else jnp.pad(
        weight, ((0, f_in_p - f_in), (0, f_out_p - f_out)))

    vmem1 = 2 * (tm * f_in_p + f_in_p * f_out_p + tm * f_out_p) * itemsize
    support = pl.pallas_call(
        _support_kernel,
        out_shape=jax.ShapeDtypeStruct((n_p, f_out_p), jnp.float32),
        grid_spec=pltpu.PrefetchScalarGridSpec(
            num_scalar_prefetch=0,
            grid=(n_p // tm,),
            in_specs=[
                pl.BlockSpec((tm, f_in_p), lambda i: (i, 0)),
                pl.BlockSpec((f_in_p, f_out_p), lambda i: (0, 0)),
            ],
            out_specs=pl.BlockSpec((tm, f_out_p), lambda i: (i, 0)),
        ),
        compiler_params=pltpu.CompilerParams(
            dimension_semantics=("parallel",),
            vmem_limit_bytes=min(max(vmem1 + (8 << 20), 32 << 20), 64 << 20),
        ),
    )(x_p, w_p)

    # ---- output = adj @ support + bias ----
    # adj streams in its stored dtype; only pad when N is not tile-aligned.
    adj_p = adj if n_p == n else jnp.pad(adj, ((0, n_p - n), (0, n_p - n)))
    adj_itemsize = jnp.dtype(adj_p.dtype).itemsize

    # Bias folded into the accumulator init (zero row when bias is None —
    # it is a single (1, f_out_p) f32 row fetched exactly once).
    if bias is None:
        b_p = jnp.zeros((1, f_out_p), jnp.float32)
    else:
        b_p = jnp.pad(bias.reshape(1, f_out).astype(jnp.float32),
                      ((0, 0), (0, f_out_p - f_out)))

    # Keep the whole support matrix VMEM-resident (constant index_map ->
    # fetched once) unless it would blow the budget; otherwise fall back to
    # streaming K-slabs.
    resident_bytes = 2 * n_p * f_out_p * itemsize  # worst case double-buffered
    support_resident = resident_bytes <= resident_support_budget_bytes

    if support_resident:
        support_spec = pl.BlockSpec((n_p, f_out_p), lambda i, k: (0, 0))
        support_vmem = resident_bytes
    else:
        support_spec = pl.BlockSpec((tk, f_out_p), lambda i, k: (k, 0))
        support_vmem = 2 * tk * f_out_p * itemsize

    vmem2 = (2 * tm * tk * adj_itemsize        # adj tiles (double-buffered)
             + support_vmem                    # support
             + 2 * 8 * f_out_p * itemsize      # bias row (padded tile)
             + 2 * tm * f_out_p * itemsize)    # resident output block
    vmem2 = min(max(vmem2 + (8 << 20), 32 << 20), 64 << 20)

    out_p = pl.pallas_call(
        _make_aggregate_kernel(tk, support_resident),
        out_shape=jax.ShapeDtypeStruct((n_p, f_out_p), jnp.float32),
        grid_spec=pltpu.PrefetchScalarGridSpec(
            num_scalar_prefetch=0,
            grid=(n_p // tm, n_p // tk),
            in_specs=[
                pl.BlockSpec((tm, tk), lambda i, k: (i, k)),   # adj (dominant)
                support_spec,                                   # support
                pl.BlockSpec((1, f_out_p), lambda i, k: (0, 0)),  # bias row
            ],
            out_specs=pl.BlockSpec((tm, f_out_p), lambda i, k: (i, 0)),
        ),
        compiler_params=pltpu.CompilerParams(
            dimension_semantics=("parallel", "arbitrary"),
            vmem_limit_bytes=vmem2,
        ),
    )(adj_p, support, b_p)

    return out_p[:n, :f_out]


if __name__ == "__main__":
    # Small, deterministic problem: 512 nodes, 64 input features, 32 output features.
    N, F_IN, F_OUT = 512, 64, 32

    key = jax.random.PRNGKey(0)
    kx, kadj, kw, kb = jax.random.split(key, 4)

    x = jax.random.normal(kx, (N, F_IN), dtype=jnp.float32)

    # Symmetric, row-normalized dense "adjacency" (spmm on dense == mm).
    a = (jax.random.uniform(kadj, (N, N)) > 0.8).astype(jnp.float32)
    a = jnp.minimum(a + a.T + jnp.eye(N, dtype=jnp.float32), 1.0)
    adj = a / jnp.sum(a, axis=1, keepdims=True)

    # Param init matching reset_parameters(): uniform(-stdv, stdv), stdv = 1/sqrt(F_OUT).
    stdv = 1.0 / (F_OUT ** 0.5)
    weight = jax.random.uniform(kw, (F_IN, F_OUT), minval=-stdv, maxval=stdv,
                                dtype=jnp.float32)
    bias = jax.random.uniform(kb, (F_OUT,), minval=-stdv, maxval=stdv,
                              dtype=jnp.float32)

    # tm=tk=256 so the demo exercises multi-step K accumulation AND a >=2
    # row-tile grid; production defaults are tm=512, tk=1024.
    out = graph_convolution(x, adj, weight, bias, tm=256, tk=256)
    out = jax.block_until_ready(out)

    out_nb = graph_convolution(x, adj, weight, None, tm=256, tk=256)
    out_nb = jax.block_until_ready(out_nb)

    # Reference in plain JAX (f32).  Tolerance covers MXU accumulation-order
    # and pass-splitting differences.
    ref = adj @ (x @ weight) + bias
    ref_nb = adj @ (x @ weight)
    assert out.shape == (N, F_OUT)
    assert out_nb.shape == (N, F_OUT)
    assert jnp.allclose(out, ref, atol=2e-2, rtol=2e-2), "mismatch vs reference (bias)"
    assert jnp.allclose(out_nb, ref_nb, atol=2e-2, rtol=2e-2), "mismatch vs reference (no bias)"

    print("KERNEL_OK")
</pallas_src>

<mosaic_0001>
module attributes {stable_mosaic.version = 11 : i64} {
  func.func @_support_kernel(%arg0: i32, %arg1: memref<256x128xf32, #tpu.memory_space<vmem>>, %arg2: memref<128x128xf32, #tpu.memory_space<vmem>>, %arg3: memref<256x128xf32, #tpu.memory_space<vmem>>) attributes {dimension_semantics = [#tpu.dimension_semantics<parallel>], iteration_bounds = array<i64: 2>, scalar_prefetch = 0 : i64, scratch_operands = 0 : i64, tpu.core_type = #tpu.core_type<tc>, window_params = [{transform_indices = @transform_0, window_bounds = array<i64: 256, 128>}, {pipeline_mode = #tpu.pipeline_mode<synchronous>, transform_indices = @transform_1, window_bounds = array<i64: 128, 128>}, {transform_indices = @transform_2, window_bounds = array<i64: 256, 128>}]} {
    %c0 = arith.constant 0 : index
    %c0_0 = arith.constant 0 : index
    %0 = vector.load %arg1[%c0, %c0_0] : memref<256x128xf32, #tpu.memory_space<vmem>>, vector<256x128xf32>
    %c0_1 = arith.constant 0 : index
    %c0_2 = arith.constant 0 : index
    %1 = vector.load %arg2[%c0_1, %c0_2] : memref<128x128xf32, #tpu.memory_space<vmem>>, vector<128x128xf32>
    %cst = arith.constant dense<0.000000e+00> : vector<256x128xf32>
    %2 = tpu.matmul %0, %1, %cst {dimension_numbers = #tpu.dot_dimension_numbers<[1], [0], [0], [1], [0, 0, 1, 1], [], []>} : vector<256x128xf32>, vector<128x128xf32>, vector<256x128xf32> -> vector<256x128xf32>
    %c0_3 = arith.constant 0 : index
    %c0_4 = arith.constant 0 : index
    %3 = vector.load %arg3[%c0_3, %c0_4] : memref<256x128xf32, #tpu.memory_space<vmem>>, vector<256x128xf32>
    tpu.vector_store %arg3[%c0_3, %c0_4], %2 {strides = array<i32>} : memref<256x128xf32, #tpu.memory_space<vmem>>, vector<256x128xf32>,
    return
  }
  func.func @transform_0(%arg0: i32) -> (i32, i32) {
    %c0_i32 = arith.constant 0 : i32
    %c0_i32_0 = arith.constant 0 : i32
    return %arg0, %c0_i32 : i32, i32
  }
  func.func @transform_1(%arg0: i32) -> (i32, i32) {
    %c0_i32 = arith.constant 0 : i32
    %c0_i32_0 = arith.constant 0 : i32
    %c0_i32_1 = arith.constant 0 : i32
    return %c0_i32, %c0_i32_0 : i32, i32
  }
  func.func @transform_2(%arg0: i32) -> (i32, i32) {
    %c0_i32 = arith.constant 0 : i32
    %c0_i32_0 = arith.constant 0 : i32
    return %arg0, %c0_i32 : i32, i32
  }
}

</mosaic_0001>

<llo_original>
// kernel: tpu_custom_call.1
$region0: #{tpu_custom_call.1}
  #allocation0 [shape = 'u32[]', space=smem, size = 0x4, offset = 0x4, fixed_abs, tag = 'smem constant byte address 0x4 - core index']
  #allocation1 [shape = 'u32[144,128]{1,0:T(1,128)}', space=vmem, size = 0x12000, scoped, tag = 'internal scratch']
  %s0 = inlined_call_operand.hbm [shape: f32[512,128], index: 0, kind: input, shape index: {}]
  %s1 = inlined_call_operand.hbm [shape: f32[128,128], index: 1, kind: input, shape index: {}]
  %s2 = inlined_call_operand.hbm [shape: f32[512,128], index: 2, kind: output, shape index: {}]
  %s3 = sld [smem:[#allocation0]]
  $region49: #{tpu_custom_call.1} parent=0
    _
  %s5 = ssub.s32 1, %s3
  %s6 = scalar_select 0, %s5, %s3
  $region1: #{tpu_custom_call.1} parent=0
    #allocation2 [shape = 'u8[262144]{0}', space=vmem, size = 0x40000, scoped, tag = 'input window, operand 0']
    #allocation3 [shape = 's32[2]{0}', space=sflag, size = 0x8, scoped, tag = 'scoped memory for tpu_custom_call.1']
    #allocation4 [shape = 's32[2]{0}', space=sflag, size = 0x8, scoped, tag = 'scoped memory for tpu_custom_call.1']
    #allocation5 [shape = 'u8[65536]{0}', space=vmem, size = 0x10000, scoped, tag = 'input window, operand 1, single buffered']
    #allocation6 [shape = 's32[1]{0}', space=sflag, size = 0x4, scoped, tag = 'scoped memory for tpu_custom_call.1']
    #allocation7 [shape = 'u8[262144]{0}', space=vmem, size = 0x40000, scoped, tag = 'output window, operand 0']
    %7 = vsyncpa [#allocation3], 0
    %s8 = scalar_lea.sflag [#allocation3], 1
    %9 = vsyncpa %s8, 0
    %10 = vsyncpa [#allocation6], 0
    %11 = vsyncpa [#allocation4], 0
    %s12 = scalar_lea.sflag [#allocation4], 1
    %13 = vsyncpa %s12, 0
    loop: start=0, step=1, limit=4
    $region2: #{tpu_custom_call.1} parent=1 // loop_pre_header
      _
    $region3: #{tpu_custom_call.1} parent=1 // loop_header
      %s15 = sphi 0, %s19
      %p16 = scmp.ge.s32.totalorder %s15, 4
      %s25 = sphi 0, %s27
      %s28 = sphi 0, %s25
      %s29 = sphi 0, %s28
      %s45 = sphi 0, %s29
      %s49 = sphi 0, %s49
      %s51 = sphi 0, %s49
      %s52 = sphi 0, %s51
      %s66 = sphi 0, %s52
      %s72 = sphi 0, %s74
      %s75 = sphi 0, %s72
      %s76 = sphi 0, %s75
      %s92 = sphi 0, %s76
    $region4: #{tpu_custom_call.1} parent=1 // loop_header_branch
      %18 = sbr.rel (%p16) target = $region8
    $region5: #{tpu_custom_call.1} parent=1 // loop_body
      %s20 = ssub.s32 %s15, 1
      %s21 = ssub.s32 %s15, 2
      %s22 = sadd.s32 %s15, 1
      %s23 = ssub.s32 %s15, %s22
      %p24 = scmp.eq.s32.totalorder %s23, 0
      %s26 = sadd.s32 %s25, 1
      %s27 = scalar_select %p24, %s25, %s26
      %p30 = pneg %p24
      %p31 = scmp.eq.s32.totalorder %s15, 1
      %p32 = por %p30, %p31
      %p33 = scmp.ne.s32.totalorder %s25, %s28
      %p34 = scmp.eq.s32.totalorder %s15, 0
      %p35 = por %p33, %p34
      %p36 = scmp.ne.s32.totalorder %s25, %s28
      %p37 = scmp.eq.s32.totalorder %s20, 1
      %p38 = por %p36, %p37
      %p39 = scmp.ne.s32.totalorder %s28, %s29
      %p40 = scmp.eq.s32.totalorder %s20, 0
      %p41 = por %p39, %p40
      %p42 = scmp.ne.s32.totalorder %s28, %s29
      %p43 = scmp.eq.s32.totalorder %s21, 1
      %p44 = por %p42, %p43
      %p46 = scmp.ne.s32.totalorder %s29, %s45
      %p47 = scmp.eq.s32.totalorder %s21, 0
      %p48 = por %p46, %p47
      %s50 = sadd.s32 %s49, 1
      %p53 = scmp.eq.s32.totalorder %s15, 1
      %p54 = scmp.ne.s32.totalorder %s49, %s51
      %p55 = scmp.eq.s32.totalorder %s15, 0
      %p56 = por %p54, %p55
      %p57 = scmp.ne.s32.totalorder %s49, %s51
      %p58 = scmp.eq.s32.totalorder %s20, 1
      %p59 = por %p57, %p58
      %p60 = scmp.ne.s32.totalorder %s51, %s52
      %p61 = scmp.eq.s32.totalorder %s20, 0
      %p62 = por %p60, %p61
      %p63 = scmp.ne.s32.totalorder %s51, %s52
      %p64 = scmp.eq.s32.totalorder %s21, 1
      %p65 = por %p63, %p64
      %p67 = scmp.ne.s32.totalorder %s52, %s66
      %p68 = scmp.eq.s32.totalorder %s21, 0
      %p69 = por %p67, %p68
      %s70 = ssub.s32 %s15, %s22
      %p71 = scmp.eq.s32.totalorder %s70, 0
      %s73 = sadd.s32 %s72, 1
      %s74 = scalar_select %p71, %s72, %s73
      %p77 = pneg %p71
      %p78 = scmp.eq.s32.totalorder %s15, 1
      %p79 = por %p77, %p78
      %p80 = scmp.ne.s32.totalorder %s72, %s75
      %p81 = scmp.eq.s32.totalorder %s15, 0
      %p82 = por %p80, %p81
      %p83 = scmp.ne.s32.totalorder %s72, %s75
      %p84 = scmp.eq.s32.totalorder %s20, 1
      %p85 = por %p83, %p84
      %p86 = scmp.ne.s32.totalorder %s75, %s76
      %p87 = scmp.eq.s32.totalorder %s20, 0
      %p88 = por %p86, %p87
      %p89 = scmp.ne.s32.totalorder %s75, %s76
      %p90 = scmp.eq.s32.totalorder %s21, 1
      %p91 = por %p89, %p90
      %p93 = scmp.ne.s32.totalorder %s76, %s92
      %p94 = scmp.eq.s32.totalorder %s21, 0
      %p95 = por %p93, %p94
      %p96 = scmp.le.s32.totalorder 1, %s15
      %p97 = scmp.lt.s32.totalorder %s15, 3
      %p98 = pnand %p96, %p97
      %p99 = pneg %p98
      // Predicated region
      $region9: #{tpu_custom_call.1} parent=5 // pred_check
        _
      $region10: #{tpu_custom_call.1} parent=5 // pred_check_branch
        %101 = sbr.rel (%p98) target = $region12
      $region11: #{tpu_custom_call.1} parent=5 // pred_region
        %s102 = ssub.s32 %s15, 1
        // Predicated region
        $region13: #{tpu_custom_call.1} parent=11 // pred_check
          %p103 = pneg %p62
        $region14: #{tpu_custom_call.1} parent=11 // pred_check_branch
          %105 = sbr.rel (%p103) target = $region16
        $region15: #{tpu_custom_call.1} parent=11 // pred_region
          %s107 = ssub.s32 2048, 2048
          %108 = vsyncadd [#allocation6], %s107
          %s109 = sshll.u32 [#allocation5], 4
          %s110 = int_to_ptr.vmem [resolvable:$true] %s109
          %115 = dma.hbm_to_vmem [thread:$0]  %s1, 2048, %s110, [#allocation6], 128, 128, 8
        $region16: #{tpu_custom_call.1} parent=11 // pred_fallthru
          _
      $region12: #{tpu_custom_call.1} parent=5 // pred_fallthru
        _
      %p116 = scmp.lt.s32.totalorder %s15, 2
      // Predicated region
      $region17: #{tpu_custom_call.1} parent=5 // pred_check
        %p117 = pneg %p116
      $region18: #{tpu_custom_call.1} parent=5 // pred_check_branch
        %119 = sbr.rel (%p117) target = $region20
      $region19: #{tpu_custom_call.1} parent=5 // pred_region
        // Predicated region
        $region21: #{tpu_custom_call.1} parent=19 // pred_check
          %p120 = pneg %p35
        $region22: #{tpu_custom_call.1} parent=19 // pred_check_branch
          %122 = sbr.rel (%p120) target = $region24
        $region23: #{tpu_custom_call.1} parent=19 // pred_region
          %s123 = sand.u32 %s25, 1
          %s124 = scalar_lea.sflag [#allocation3], %s123
          %s125 = sand.u32 %s25, 1
          %s126 = smul.addr %s125, 256
          %s127 = scalar_lea.vmem [#allocation2], %s126
          %s128 = smul.u32 32, %s15
          %s130 = ssub.s32 4096, 4096
          %131 = vsyncadd %s124, %s130
          %s132 = smul.addr %s128, 128
          %s133 = scalar_lea.hbm %s0, %s132
          %s134 = sshll.u32 %s127, 4
          %s135 = int_to_ptr.vmem [resolvable:$true] %s134
          %140 = dma.hbm_to_vmem [thread:$0]  %s133, 4096, %s135, %s124, 128, 128, 8
        $region24: #{tpu_custom_call.1} parent=19 // pred_fallthru
          _
      $region20: #{tpu_custom_call.1} parent=5 // pred_fallthru
        _
      %p141 = scmp.le.s32.totalorder 1, %s15
      %p142 = scmp.lt.s32.totalorder %s15, 3
      %p143 = pnand %p141, %p142
      %p144 = pneg %p143
      // Predicated region
      $region25: #{tpu_custom_call.1} parent=5 // pred_check
        _
      $region26: #{tpu_custom_call.1} parent=5 // pred_check_branch
        %146 = sbr.rel (%p143) target = $region28
      $region27: #{tpu_custom_call.1} parent=5 // pred_region
        %s147 = ssub.s32 %s15, 1
        %s148 = sand.u32 %s28, 1
        %s149 = scalar_lea.sflag [#allocation3], %s148
        %s150 = sand.u32 %s28, 1
        %s151 = smul.addr %s150, 256
        %s152 = scalar_lea.vmem [#allocation2], %s151
        // Predicated region
        $region29: #{tpu_custom_call.1} parent=27 // pred_check
          %p153 = pneg %p41
        $region30: #{tpu_custom_call.1} parent=27 // pred_check_branch
          %155 = sbr.rel (%p153) target = $region32
        $region31: #{tpu_custom_call.1} parent=27 // pred_region
          %156 = dma.done %s149, 4096
        $region32: #{tpu_custom_call.1} parent=27 // pred_fallthru
          _
        // Predicated region
        $region33: #{tpu_custom_call.1} parent=27 // pred_check
          %p157 = pneg %p62
        $region34: #{tpu_custom_call.1} parent=27 // pred_check_branch
          %159 = sbr.rel (%p157) target = $region36
        $region35: #{tpu_custom_call.1} parent=27 // pred_region
          %160 = dma.done [#allocation6], 2048
        $region36: #{tpu_custom_call.1} parent=27 // pred_fallthru
          _
        %s161 = sand.u32 %s28, 1
        %s162 = scalar_lea.sflag [#allocation3], %s161
        %s163 = sand.u32 %s28, 1
        %s164 = smul.addr %s163, 256
        %s165 = scalar_lea.vmem [#allocation2], %s164
        %p166 = pneg %p41
        %p167 = pneg %p38
        %p168 = pneg %p62
        %p169 = pneg %p59
        %p170 = pneg %p88
        %p171 = pneg %p85
        %s172 = sand.u32 %s75, 1
        %s173 = scalar_lea.sflag [#allocation4], %s172
        %s174 = sand.u32 %s75, 1
        %s175 = smul.addr %s174, 256
        %s176 = scalar_lea.vmem [#allocation7], %s175
        %s177 = smul.u32 32, %s20
        %s178 = smul.u32 32, %s20
        %v179 = vld [vmem:[%s152] sm:$0xff]
        %v180 = vld [vmem:[%s152 + $0x8] sm:$0xff]
        %v181 = vld [vmem:[%s152 + $0x10] sm:$0xff]
        %v182 = vld [vmem:[%s152 + $0x18] sm:$0xff]
        %v183 = vld [vmem:[%s152 + $0x20] sm:$0xff]
        %v184 = vld [vmem:[%s152 + $0x28] sm:$0xff]
        %v185 = vld [vmem:[%s152 + $0x30] sm:$0xff]
        %v186 = vld [vmem:[%s152 + $0x38] sm:$0xff]
        %v187 = vld [vmem:[%s152 + $0x40] sm:$0xff]
        %v188 = vld [vmem:[%s152 + $0x48] sm:$0xff]
        %v189 = vld [vmem:[%s152 + $0x50] sm:$0xff]
        %v190 = vld [vmem:[%s152 + $0x58] sm:$0xff]
        %v191 = vld [vmem:[%s152 + $0x60] sm:$0xff]
        %v192 = vld [vmem:[%s152 + $0x68] sm:$0xff]
        %v193 = vld [vmem:[%s152 + $0x70] sm:$0xff]
        %v194 = vld [vmem:[%s152 + $0x78] sm:$0xff]
        %v195 = vld [vmem:[%s152 + $0x80] sm:$0xff]
        %v196 = vld [vmem:[%s152 + $0x88] sm:$0xff]
        %v197 = vld [vmem:[%s152 + $0x90] sm:$0xff]
        %v198 = vld [vmem:[%s152 + $0x98] sm:$0xff]
        %v199 = vld [vmem:[%s152 + $0xa0] sm:$0xff]
        %v200 = vld [vmem:[%s152 + $0xa8] sm:$0xff]
        %v201 = vld [vmem:[%s152 + $0xb0] sm:$0xff]
        %v202 = vld [vmem:[%s152 + $0xb8] sm:$0xff]
        %v203 = vld [vmem:[%s152 + $0xc0] sm:$0xff]
        %v204 = vld [vmem:[%s152 + $0xc8] sm:$0xff]
        %v205 = vld [vmem:[%s152 + $0xd0] sm:$0xff]
        %v206 = vld [vmem:[%s152 + $0xd8] sm:$0xff]
        %v207 = vld [vmem:[%s152 + $0xe0] sm:$0xff]
        %v208 = vld [vmem:[%s152 + $0xe8] sm:$0xff]
        %v209 = vld [vmem:[%s152 + $0xf0] sm:$0xff]
        %v210 = vld [vmem:[%s152 + $0xf8] sm:$0xff]
        %v211 = vld [vmem:[#allocation5] sm:$0xff]
        %v212 = vld [vmem:[#allocation5 + $0x8] sm:$0xff]
        %v213 = vld [vmem:[#allocation5 + $0x10] sm:$0xff]
        %v214 = vld [vmem:[#allocation5 + $0x18] sm:$0xff]
        %v215 = vld [vmem:[#allocation5 + $0x20] sm:$0xff]
        %v216 = vld [vmem:[#allocation5 + $0x28] sm:$0xff]
        %v217 = vld [vmem:[#allocation5 + $0x30] sm:$0xff]
        %v218 = vld [vmem:[#allocation5 + $0x38] sm:$0xff]
        %v219 = vld [vmem:[#allocation5 + $0x40] sm:$0xff]
        %v220 = vld [vmem:[#allocation5 + $0x48] sm:$0xff]
        %v221 = vld [vmem:[#allocation5 + $0x50] sm:$0xff]
        %v222 = vld [vmem:[#allocation5 + $0x58] sm:$0xff]
        %v223 = vld [vmem:[#allocation5 + $0x60] sm:$0xff]
        %v224 = vld [vmem:[#allocation5 + $0x68] sm:$0xff]
        %v225 = vld [vmem:[#allocation5 + $0x70] sm:$0xff]
        %v226 = vld [vmem:[#allocation5 + $0x78] sm:$0xff]
        %227 = vmatprep.subr.mxu0 0.0
        %228 = vmatpush1.msra.mxu0 %v226
        %229 = vmatprep.subr.mxu0 0.0
        %230 = vmatpush1.msra.mxu0 %v225
        %231 = vmatprep.subr.mxu0 0.0
        %232 = vmatpush1.msra.mxu0 %v224
        %233 = vmatprep.subr.mxu0 0.0
        %234 = vmatpush1.msra.mxu0 %v223
        %235 = vmatprep.subr.mxu0 0.0
        %236 = vmatpush1.msra.mxu0 %v222
        %237 = vmatprep.subr.mxu0 0.0
        %238 = vmatpush1.msra.mxu0 %v221
        %239 = vmatprep.subr.mxu0 0.0
        %240 = vmatpush1.msra.mxu0 %v220
        %241 = vmatprep.subr.mxu0 0.0
        %242 = vmatpush1.msra.mxu0 %v219
        %243 = vmatprep.subr.mxu0 0.0
        %244 = vmatpush1.msra.mxu0 %v218
        %245 = vmatprep.subr.mxu0 0.0
        %246 = vmatpush1.msra.mxu0 %v217
        %247 = vmatprep.subr.mxu0 0.0
        %248 = vmatpush1.msra.mxu0 %v216
        %249 = vmatprep.subr.mxu0 0.0
        %250 = vmatpush1.msra.mxu0 %v215
        %251 = vmatprep.subr.mxu0 0.0
        %252 = vmatpush1.msra.mxu0 %v214
        %253 = vmatprep.subr.mxu0 0.0
        %254 = vmatpush1.msra.mxu0 %v213
        %255 = vmatprep.subr.mxu0 0.0
        %256 = vmatpush1.msra.mxu0 %v212
        %257 = vmatprep.subr.mxu0 0.0
        %258 = vmatpush1.msra.mxu0 %v211
        %259 = vmatprep.subr.mxu0 0.0
        %260 = vmatpush2.msra.mxu0 0.0
        %261 = vmatprep.subr.mxu0 0.0
        %262 = vmatpush2.msra.mxu0 0.0
        %263 = vmatprep.subr.mxu0 0.0
        %264 = vmatpush2.msra.mxu0 0.0
        %265 = vmatprep.subr.mxu0 0.0
        %266 = vmatpush2.msra.mxu0 0.0
        %267 = vmatprep.subr.mxu0 0.0
        %268 = vmatpush2.msra.mxu0 0.0
        %269 = vmatprep.subr.mxu0 0.0
        %270 = vmatpush2.msra.mxu0 0.0
        %271 = vmatprep.subr.mxu0 0.0
        %272 = vmatpush2.msra.mxu0 0.0
        %273 = vmatprep.subr.mxu0 0.0
        %274 = vmatpush2.msra.mxu0 0.0
        %275 = vmatprep.subr.mxu0 0.0
        %276 = vmatpush2.msra.mxu0 0.0
        %277 = vmatprep.subr.mxu0 0.0
        %278 = vmatpush2.msra.mxu0 0.0
        %279 = vmatprep.subr.mxu0 0.0
        %280 = vmatpush2.msra.mxu0 0.0
        %281 = vmatprep.subr.mxu0 0.0
        %282 = vmatpush2.msra.mxu0 0.0
        %283 = vmatprep.subr.mxu0 0.0
        %284 = vmatpush2.msra.mxu0 0.0
        %285 = vmatprep.subr.mxu0 0.0
        %286 = vmatpush2.msra.mxu0 0.0
        %287 = vmatprep.subr.mxu0 0.0
        %288 = vmatpush2.msra.mxu0 0.0
        %289 = vmatprep.subr.mxu0 0.0
        %290 = vmatpush2.msra.mxu0 0.0
        %291 = vmatprep.mubr.f32.mxu0 0.0
        %292 = vmatmul.mubr.f32.gmra.mxu0 %v179
        %v293 = vpop.f32.mrf.mxu0
        %v294 = vadd.f32 0.0, %v293
        %v295 = vpop.f32.mrf.mxu0
        %296 = vmatprep.mubr.f32.mxu0 0.0
        %297 = vmatmul.mubr.f32.gmra.mxu0 %v180
        %v298 = vpop.f32.mrf.mxu0
        %v299 = vadd.f32 0.0, %v298
        %v300 = vpop.f32.mrf.mxu0
        %301 = vmatprep.mubr.f32.mxu0 0.0
        %302 = vmatmul.mubr.f32.gmra.mxu0 %v181
        %v303 = vpop.f32.mrf.mxu0
        %v304 = vadd.f32 0.0, %v303
        %v305 = vpop.f32.mrf.mxu0
        %306 = vmatprep.mubr.f32.mxu0 0.0
        %307 = vmatmul.mubr.f32.gmra.mxu0 %v182
        %v308 = vpop.f32.mrf.mxu0
        %v309 = vadd.f32 0.0, %v308
        %v310 = vpop.f32.mrf.mxu0
        %311 = vmatprep.mubr.f32.mxu0 0.0
        %312 = vmatmul.mubr.f32.gmra.mxu0 %v183
        %v313 = vpop.f32.mrf.mxu0
        %v314 = vadd.f32 0.0, %v313
        %v315 = vpop.f32.mrf.mxu0
        %316 = vmatprep.mubr.f32.mxu0 0.0
        %317 = vmatmul.mubr.f32.gmra.mxu0 %v184
        %v318 = vpop.f32.mrf.mxu0
        %v319 = vadd.f32 0.0, %v318
        %v320 = vpop.f32.mrf.mxu0
        %321 = vmatprep.mubr.f32.mxu0 0.0
        %322 = vmatmul.mubr.f32.gmra.mxu0 %v185
        %v323 = vpop.f32.mrf.mxu0
        %v324 = vadd.f32 0.0, %v323
        %v325 = vpop.f32.mrf.mxu0
        %326 = vmatprep.mubr.f32.mxu0 0.0
        %327 = vmatmul.mubr.f32.gmra.mxu0 %v186
        %v328 = vpop.f32.mrf.mxu0
        %v329 = vadd.f32 0.0, %v328
        %v330 = vpop.f32.mrf.mxu0
        %331 = vmatprep.mubr.f32.mxu0 0.0
        %332 = vmatmul.mubr.f32.gmra.mxu0 %v187
        %v333 = vpop.f32.mrf.mxu0
        %v334 = vadd.f32 0.0, %v333
        %v335 = vpop.f32.mrf.mxu0
        %336 = vmatprep.mubr.f32.mxu0 0.0
        %337 = vmatmul.mubr.f32.gmra.mxu0 %v188
        %v338 = vpop.f32.mrf.mxu0
        %v339 = vadd.f32 0.0, %v338
        %v340 = vpop.f32.mrf.mxu0
        %341 = vmatprep.mubr.f32.mxu0 0.0
        %342 = vmatmul.mubr.f32.gmra.mxu0 %v189
        %v343 = vpop.f32.mrf.mxu0
        %v344 = vadd.f32 0.0, %v343
        %v345 = vpop.f32.mrf.mxu0
        %346 = vmatprep.mubr.f32.mxu0 0.0
        %347 = vmatmul.mubr.f32.gmra.mxu0 %v190
        %v348 = vpop.f32.mrf.mxu0
        %v349 = vadd.f32 0.0, %v348
        %v350 = vpop.f32.mrf.mxu0
        %351 = vmatprep.mubr.f32.mxu0 0.0
        %352 = vmatmul.mubr.f32.gmra.mxu0 %v191
        %v353 = vpop.f32.mrf.mxu0
        %v354 = vadd.f32 0.0, %v353
        %v355 = vpop.f32.mrf.mxu0
        %356 = vmatprep.mubr.f32.mxu0 0.0
        %357 = vmatmul.mubr.f32.gmra.mxu0 %v192
        %v358 = vpop.f32.mrf.mxu0
        %v359 = vadd.f32 0.0, %v358
        %v360 = vpop.f32.mrf.mxu0
        %361 = vmatprep.mubr.f32.mxu0 0.0
        %362 = vmatmul.mubr.f32.gmra.mxu0 %v193
        %v363 = vpop.f32.mrf.mxu0
        %v364 = vadd.f32 0.0, %v363
        %v365 = vpop.f32.mrf.mxu0
        %366 = vmatprep.mubr.f32.mxu0 0.0
        %367 = vmatmul.mubr.f32.gmra.mxu0 %v194
        %v368 = vpop.f32.mrf.mxu0
        %v369 = vadd.f32 0.0, %v368
        %v370 = vpop.f32.mrf.mxu0
        %371 = vmatprep.mubr.f32.mxu0 0.0
        %372 = vmatmul.mubr.f32.gmra.mxu0 %v195
        %v373 = vpop.f32.mrf.mxu0
        %v374 = vadd.f32 0.0, %v373
        %v375 = vpop.f32.mrf.mxu0
        %376 = vmatprep.mubr.f32.mxu0 0.0
        %377 = vmatmul.mubr.f32.gmra.mxu0 %v196
        %v378 = vpop.f32.mrf.mxu0
        %v379 = vadd.f32 0.0, %v378
        %v380 = vpop.f32.mrf.mxu0
        %381 = vmatprep.mubr.f32.mxu0 0.0
        %382 = vmatmul.mubr.f32.gmra.mxu0 %v197
        %v383 = vpop.f32.mrf.mxu0
        %v384 = vadd.f32 0.0, %v383
        %v385 = vpop.f32.mrf.mxu0
        %386 = vmatprep.mubr.f32.mxu0 0.0
        %387 = vmatmul.mubr.f32.gmra.mxu0 %v198
        %v388 = vpop.f32.mrf.mxu0
        %v389 = vadd.f32 0.0, %v388
        %v390 = vpop.f32.mrf.mxu0
        %391 = vmatprep.mubr.f32.mxu0 0.0
        %392 = vmatmul.mubr.f32.gmra.mxu0 %v199
        %v393 = vpop.f32.mrf.mxu0
        %v394 = vadd.f32 0.0, %v393
        %v395 = vpop.f32.mrf.mxu0
        %396 = vmatprep.mubr.f32.mxu0 0.0
        %397 = vmatmul.mubr.f32.gmra.mxu0 %v200
        %v398 = vpop.f32.mrf.mxu0
        %v399 = vadd.f32 0.0, %v398
        %v400 = vpop.f32.mrf.mxu0
        %401 = vmatprep.mubr.f32.mxu0 0.0
        %402 = vmatmul.mubr.f32.gmra.mxu0 %v201
        %v403 = vpop.f32.mrf.mxu0
        %v404 = vadd.f32 0.0, %v403
        %v405 = vpop.f32.mrf.mxu0
        %406 = vmatprep.mubr.f32.mxu0 0.0
        %407 = vmatmul.mubr.f32.gmra.mxu0 %v202
        %v408 = vpop.f32.mrf.mxu0
        %v409 = vadd.f32 0.0, %v408
        %v410 = vpop.f32.mrf.mxu0
        %411 = vmatprep.mubr.f32.mxu0 0.0
        %412 = vmatmul.mubr.f32.gmra.mxu0 %v203
        %v413 = vpop.f32.mrf.mxu0
        %v414 = vadd.f32 0.0, %v413
        %v415 = vpop.f32.mrf.mxu0
        %416 = vmatprep.mubr.f32.mxu0 0.0
        %417 = vmatmul.mubr.f32.gmra.mxu0 %v204
        %v418 = vpop.f32.mrf.mxu0
        %v419 = vadd.f32 0.0, %v418
        %v420 = vpop.f32.mrf.mxu0
        %421 = vmatprep.mubr.f32.mxu0 0.0
        %422 = vmatmul.mubr.f32.gmra.mxu0 %v205
        %v423 = vpop.f32.mrf.mxu0
        %v424 = vadd.f32 0.0, %v423
        %v425 = vpop.f32.mrf.mxu0
        %426 = vmatprep.mubr.f32.mxu0 0.0
        %427 = vmatmul.mubr.f32.gmra.mxu0 %v206
        %v428 = vpop.f32.mrf.mxu0
        %v429 = vadd.f32 0.0, %v428
        %v430 = vpop.f32.mrf.mxu0
        %431 = vmatprep.mubr.f32.mxu0 0.0
        %432 = vmatmul.mubr.f32.gmra.mxu0 %v207
        %v433 = vpop.f32.mrf.mxu0
        %v434 = vadd.f32 0.0, %v433
        %v435 = vpop.f32.mrf.mxu0
        %436 = vmatprep.mubr.f32.mxu0 0.0
        %437 = vmatmul.mubr.f32.gmra.mxu0 %v208
        %v438 = vpop.f32.mrf.mxu0
        %v439 = vadd.f32 0.0, %v438
        %v440 = vpop.f32.mrf.mxu0
        %441 = vmatprep.mubr.f32.mxu0 0.0
        %442 = vmatmul.mubr.f32.gmra.mxu0 %v209
        %v443 = vpop.f32.mrf.mxu0
        %v444 = vadd.f32 0.0, %v443
        %v445 = vpop.f32.mrf.mxu0
        %446 = vmatprep.mubr.f32.mxu0 0.0
        %447 = vmatmul.mubr.f32.gmra.mxu0 %v210
        %v448 = vpop.f32.mrf.mxu0
        %v449 = vadd.f32 0.0, %v448
        %v450 = vpop.f32.mrf.mxu0
        %451 = vdwg.mxu0
        %452 = vst [vmem:[%s176] sm:$0xff] %v294
        %453 = vst [vmem:[%s176 + $0x8] sm:$0xff] %v299
        %454 = vst [vmem:[%s176 + $0x10] sm:$0xff] %v304
        %455 = vst [vmem:[%s176 + $0x18] sm:$0xff] %v309
        %456 = vst [vmem:[%s176 + $0x20] sm:$0xff] %v314
        %457 = vst [vmem:[%s176 + $0x28] sm:$0xff] %v319
        %458 = vst [vmem:[%s176 + $0x30] sm:$0xff] %v324
        %459 = vst [vmem:[%s176 + $0x38] sm:$0xff] %v329
        %460 = vst [vmem:[%s176 + $0x40] sm:$0xff] %v334
        %461 = vst [vmem:[%s176 + $0x48] sm:$0xff] %v339
        %462 = vst [vmem:[%s176 + $0x50] sm:$0xff] %v344
        %463 = vst [vmem:[%s176 + $0x58] sm:$0xff] %v349
        %464 = vst [vmem:[%s176 + $0x60] sm:$0xff] %v354
        %465 = vst [vmem:[%s176 + $0x68] sm:$0xff] %v359
        %466 = vst [vmem:[%s176 + $0x70] sm:$0xff] %v364
        %467 = vst [vmem:[%s176 + $0x78] sm:$0xff] %v369
        %468 = vst [vmem:[%s176 + $0x80] sm:$0xff] %v374
        %469 = vst [vmem:[%s176 + $0x88] sm:$0xff] %v379
        %470 = vst [vmem:[%s176 + $0x90] sm:$0xff] %v384
        %471 = vst [vmem:[%s176 + $0x98] sm:$0xff] %v389
        %472 = vst [vmem:[%s176 + $0xa0] sm:$0xff] %v394
        %473 = vst [vmem:[%s176 + $0xa8] sm:$0xff] %v399
        %474 = vst [vmem:[%s176 + $0xb0] sm:$0xff] %v404
        %475 = vst [vmem:[%s176 + $0xb8] sm:$0xff] %v409
        %476 = vst [vmem:[%s176 + $0xc0] sm:$0xff] %v414
        %477 = vst [vmem:[%s176 + $0xc8] sm:$0xff] %v419
        %478 = vst [vmem:[%s176 + $0xd0] sm:$0xff] %v424
        %479 = vst [vmem:[%s176 + $0xd8] sm:$0xff] %v429
        %480 = vst [vmem:[%s176 + $0xe0] sm:$0xff] %v434
        %481 = vst [vmem:[%s176 + $0xe8] sm:$0xff] %v439
        %482 = vst [vmem:[%s176 + $0xf0] sm:$0xff] %v444
        %483 = vst [vmem:[%s176 + $0xf8] sm:$0xff] %v449
        %s484 = sand.u32 %s75, 1
        %s485 = scalar_lea.sflag [#allocation4], %s484
        %s486 = sand.u32 %s75, 1
        %s487 = smul.addr %s486, 256
        %s488 = scalar_lea.vmem [#allocation7], %s487
        // Predicated region
        $region37: #{tpu_custom_call.1} parent=27 // pred_check
          %p489 = pneg %p85
        $region38: #{tpu_custom_call.1} parent=27 // pred_check_branch
          %491 = sbr.rel (%p489) target = $region40
        $region39: #{tpu_custom_call.1} parent=27 // pred_region
          %s492 = smul.u32 32, %s20
          %s494 = ssub.s32 4096, 4096
          %495 = vsyncadd %s485, %s494
          %s496 = smul.addr %s492, 128
          %s497 = scalar_lea.hbm %s2, %s496
          %s498 = sshll.u32 %s488, 4
          %s499 = int_to_ptr.vmem [resolvable:$true] %s498
          %504 = dma.vmem_to_hbm [thread:$0]  %s499, 4096, %s497, %s485, 128, 128, 8
        $region40: #{tpu_custom_call.1} parent=27 // pred_fallthru
          _
      $region28: #{tpu_custom_call.1} parent=5 // pred_fallthru
        _
      %p505 = scmp.le.s32.totalorder 2, %s15
      // Predicated region
      $region41: #{tpu_custom_call.1} parent=5 // pred_check
        %p506 = pneg %p505
      $region42: #{tpu_custom_call.1} parent=5 // pred_check_branch
        %508 = sbr.rel (%p506) target = $region44
      $region43: #{tpu_custom_call.1} parent=5 // pred_region
        %s509 = ssub.s32 %s15, 2
        // Predicated region
        $region45: #{tpu_custom_call.1} parent=43 // pred_check
          %p510 = pneg %p91
        $region46: #{tpu_custom_call.1} parent=43 // pred_check_branch
          %512 = sbr.rel (%p510) target = $region48
        $region47: #{tpu_custom_call.1} parent=43 // pred_region
          %s513 = sand.u32 %s76, 1
          %s514 = scalar_lea.sflag [#allocation4], %s513
          %s515 = sand.u32 %s76, 1
          %s516 = smul.addr %s515, 256
          %s517 = scalar_lea.vmem [#allocation7], %s516
          %518 = dma.done %s514, 4096
        $region48: #{tpu_custom_call.1} parent=43 // pred_fallthru
          _
      $region44: #{tpu_custom_call.1} parent=5 // pred_fallthru
        _
    $region6: #{tpu_custom_call.1} parent=1 // loop_footer
      %s19 = sadd.s32 1, %s15
    $region7: #{tpu_custom_call.1} parent=1 // loop_footer_branch
      %14 = sbr.rel target = $region3
    $region8: #{tpu_custom_call.1} parent=1 // loop_exit
      _
    %519 = vsyncpa [#allocation3], 1
    %s520 = scalar_lea.sflag [#allocation3], 1
    %521 = vsyncpa %s520, 1
    %522 = vsyncpa [#allocation6], 1
    %523 = vsyncpa [#allocation4], 1
    %s524 = scalar_lea.sflag [#allocation4], 1
    %525 = vsyncpa %s524, 1

</llo_original>
